<compile_context>
chip_gen: v7x
topology: tpu7x:2x2x1
jax: 0.10.0
libtpu: 0.0.40
codegen_flags: <defaults>
</compile_context>

<pallas_src>
import functools

import jax
import jax.numpy as jnp
from jax import lax
from jax.experimental import pallas as pl
from jax.experimental.pallas import tpu as pltpu


def _round_up(x, m):
    return (x + m - 1) // m * m


def _vmem_capacity_bytes():
    """Physical VMEM per core; conservative v7x default if the query fails."""
    try:
        info = pltpu.get_tpu_info()
        cap = getattr(info, "vmem_capacity_bytes", None)
        if cap:
            return int(cap)
    except Exception:
        pass
    return 64 * 1024 * 1024


_TILE_CANDIDATES = (512, 256, 128)


def _block_footprint_bytes(tile_r, tile_c, d_pad, n_guess):
    x_rows = 2 * tile_r * d_pad * 2        # bf16 row block, double-buffered
    x_cols = 2 * tile_c * d_pad * 2        # bf16 col block, double-buffered
    temps = 6 * tile_r * tile_c * 4        # f32 gram/d2/mask temporaries (estimate)
    small = 8 * tile_r * 4 + 8 * n_guess   # per-row vectors/outputs + resident cols
    return x_rows + x_cols + temps + small


def _select_tiles(n, d_pad, vmem_budget):
    """Pick (tile_r, tile_c): as big as the VMEM budget allows (power-of-two
    >=128 so in-kernel offsets stay aligned), and >=2 row blocks when the batch
    is large enough so the 'parallel' row axis uses both v7x TensorCores."""
    n16 = _round_up(n, 16)                 # bf16 sublane packing granularity
    if n16 <= 128:
        return n16, n16                    # one block each way; minimal grid
    n_guess = _round_up(n16, 512)
    tile_c = 128
    for t in _TILE_CANDIDATES:
        if t <= n16 and _block_footprint_bytes(t, t, d_pad, n_guess) <= vmem_budget:
            tile_c = t
            break
    row_cap = n16 // 2 if n16 >= 256 else n16   # keep >=2 row blocks (megacore)
    tile_r = 128
    for t in _TILE_CANDIDATES:
        if t <= row_cap and _block_footprint_bytes(t, tile_c, d_pad, n_guess) <= vmem_budget:
            tile_r = t
            break
    return tile_r, tile_c


def _triplet_tile_kernel(xr_ref, xc_ref, sqr_ref, sqc_ref, tr_ref, tc_ref,
                         per_ref, ind_ref, ap_sq_ref, an_sq_ref,
                         *, margin, n_valid):
    """One (row_block, col_block) step of batch-hard triplet mining."""
    j = pl.program_id(1)
    tile_c = xc_ref.shape[0]
    n_pad = sqc_ref.shape[0] * sqc_ref.shape[1]   # total (padded) columns

    @pl.when(j == 0)
    def _init():
        ap_sq_ref[...] = jnp.full_like(ap_sq_ref, -jnp.inf)   # hardest positive (d^2)
        an_sq_ref[...] = jnp.full_like(an_sq_ref, jnp.inf)    # hardest negative (d^2)

    # Gram tile on the MXU: bf16 operands, f32 accumulation; contract the feature
    # dim of both operands so no x.T is ever materialized.
    gram = lax.dot_general(
        xr_ref[...], xc_ref[...],
        dimension_numbers=(((1,), (1,)), ((), ())),
        preferred_element_type=jnp.float32)                    # [tile_r, tile_c] f32

    # Column-side norms / labels live fully resident as (n_col_blocks, tile_c);
    # grab row j (dynamic sublane slice -> no per-step DMA, no lane-dim slicing).
    sq_c = sqc_ref[pl.ds(j, 1), :]                             # [1, tile_c] f32
    t_c = tc_ref[pl.ds(j, 1), :]                               # [1, tile_c] i32

    # Squared pairwise distances; clamp + sqrt deferred to finalization
    # (both monotone, so they commute with the running max/min).
    d2 = sqr_ref[...] + sq_c - 2.0 * gram                      # [tile_r, tile_c]

    same = tr_ref[...] == t_c                                  # [tile_r, tile_c] bool
    pos_mask = same
    if n_valid < n_pad:   # static: padding exists only when n isn't tile-aligned
        # Padded columns: huge sq_c already keeps them out of the negative min;
        # this mask keeps them out of the positive max (no label sentinel needed).
        col = j * tile_c + lax.broadcasted_iota(jnp.int32, (1, tile_c), 1)
        pos_mask = jnp.logical_and(same, col < n_valid)

    ap_sq_ref[...] = jnp.maximum(
        ap_sq_ref[...],
        jnp.max(jnp.where(pos_mask, d2, -jnp.inf), axis=1, keepdims=True))
    an_sq_ref[...] = jnp.minimum(
        an_sq_ref[...],
        jnp.min(jnp.where(same, jnp.inf, d2), axis=1, keepdims=True))

    @pl.when(j == pl.num_programs(1) - 1)
    def _finalize():
        ap = jnp.sqrt(jnp.maximum(ap_sq_ref[...], 1e-12))      # [tile_r, 1]
        an = jnp.sqrt(jnp.maximum(an_sq_ref[...], 1e-12))
        per_ref[...] = jnp.maximum(ap - an + jnp.float32(margin), 0.0)
        ind_ref[...] = (an > ap).astype(jnp.float32)


def triplet_loss(inputs: jax.Array, targets: jax.Array, margin: float = 1.0):
    """inputs: [n, d] float features; targets: [n] int labels. Returns (loss, prec)."""
    n, d = inputs.shape
    d_pad = _round_up(d, 128)                       # lane alignment

    vmem_cap = _vmem_capacity_bytes()
    vmem_budget = vmem_cap // 2                     # block working-set target
    vmem_limit = max(32 * 1024 * 1024,
                     min(int(vmem_cap * 0.85), 100 * 1024 * 1024))

    tile_r, tile_c = _select_tiles(n, d_pad, vmem_budget)
    n_pad = _round_up(n, max(tile_r, tile_c))       # divisible by both tiles
    n_cb = n_pad // tile_c

    x = inputs.astype(jnp.float32)
    # bf16 operands for the MXU Gram; zero padding keeps padded rows/cols inert.
    x_bf16 = jnp.zeros((n_pad, d_pad), jnp.bfloat16).at[:n, :d].set(
        x.astype(jnp.bfloat16))

    # Squared norms from the f32 features (keeps d2 accuracy).  Padded entries
    # get a huge norm so padded columns can never win the negative min.
    sq = jnp.sum(x * x, axis=1)
    sq_pad = jnp.full((n_pad,), jnp.float32(1e30)).at[:n].set(sq)
    t_pad = jnp.zeros((n_pad,), jnp.int32).at[:n].set(targets.astype(jnp.int32))

    sq_r = sq_pad.reshape(n_pad, 1)                 # row-oriented, tiled per row block
    t_r = t_pad.reshape(n_pad, 1)
    sq_cb = sq_pad.reshape(n_cb, tile_c)            # column-oriented, fully resident
    t_cb = t_pad.reshape(n_cb, tile_c)

    grid = (n_pad // tile_r, n_pad // tile_c)
    kernel = functools.partial(_triplet_tile_kernel,
                               margin=float(margin), n_valid=n)

    per, ind = pl.pallas_call(
        kernel,
        out_shape=(
            jax.ShapeDtypeStruct((n_pad, 1), jnp.float32),   # per-row hinge loss
            jax.ShapeDtypeStruct((n_pad, 1), jnp.float32),   # per-row (an > ap) indicator
        ),
        grid_spec=pltpu.PrefetchScalarGridSpec(
            num_scalar_prefetch=0,
            grid=grid,
            in_specs=[
                pl.BlockSpec((tile_r, d_pad), lambda i, j: (i, 0)),   # x row block (bf16)
                pl.BlockSpec((tile_c, d_pad), lambda i, j: (j, 0)),   # x col block (bf16)
                pl.BlockSpec((tile_r, 1), lambda i, j: (i, 0)),       # ||x||^2 rows
                pl.BlockSpec((n_cb, tile_c), lambda i, j: (0, 0)),    # ||x||^2 cols (resident)
                pl.BlockSpec((tile_r, 1), lambda i, j: (i, 0)),       # labels rows
                pl.BlockSpec((n_cb, tile_c), lambda i, j: (0, 0)),    # labels cols (resident)
            ],
            out_specs=(
                pl.BlockSpec((tile_r, 1), lambda i, j: (i, 0)),
                pl.BlockSpec((tile_r, 1), lambda i, j: (i, 0)),
            ),
            scratch_shapes=[
                pltpu.VMEM((tile_r, 1), jnp.float32),   # running max positive dist^2
                pltpu.VMEM((tile_r, 1), jnp.float32),   # running min negative dist^2
            ],
        ),
        compiler_params=pltpu.CompilerParams(
            dimension_semantics=("parallel", "arbitrary"),
            vmem_limit_bytes=int(vmem_limit),
        ),
    )(x_bf16, x_bf16, sq_r, sq_cb, t_r, t_cb)

    # Final tiny O(n) reduction (mean + precision) over the valid rows.
    loss = jnp.sum(per[:n, 0]) / jnp.float32(n)
    prec = jnp.sum(ind[:n, 0]) / jnp.float32(n)
    return loss, prec


def _reference(inputs, targets, margin, bf16_gram=False):
    """Pure-JAX mirror of the PyTorch batch-hard TripletLoss forward.

    bf16_gram=True mirrors the kernel's numerics (bf16 Gram on the MXU with f32
    accumulation, f32 squared norms)."""
    x = inputs.astype(jnp.float32)
    sq = jnp.sum(x * x, axis=1, keepdims=True)
    if bf16_gram:
        xb = x.astype(jnp.bfloat16)
        gram = jnp.dot(xb, xb.T, preferred_element_type=jnp.float32)
    else:
        gram = x @ x.T
    dist = sq + sq.T - 2.0 * gram
    dist = jnp.sqrt(jnp.maximum(dist, 1e-12))
    mask = targets[:, None] == targets[None, :]
    dist_ap = jnp.max(jnp.where(mask, dist, -jnp.inf), axis=1)
    dist_an = jnp.min(jnp.where(mask, jnp.inf, dist), axis=1)
    loss = jnp.mean(jnp.maximum(dist_ap - dist_an + margin, 0.0))
    prec = jnp.mean((dist_an > dist_ap).astype(jnp.float32))
    return loss, prec


if __name__ == "__main__":
    key = jax.random.PRNGKey(0)
    n, d = 8, 32  # small batch of feature embeddings
    inputs = jax.random.normal(key, (n, d), dtype=jnp.float32)
    # Deterministic labels: 4 identities x 2 samples each.
    targets = jnp.array([0, 0, 1, 1, 2, 2, 3, 3], dtype=jnp.int32)

    loss, prec = triplet_loss(inputs, targets, margin=1.0)
    jax.block_until_ready((loss, prec))

    # Tight check against a reference that mirrors the kernel numerics (bf16 Gram).
    m_loss, m_prec = _reference(inputs, targets, 1.0, bf16_gram=True)
    assert jnp.allclose(loss, m_loss, rtol=1e-3, atol=1e-3), (loss, m_loss)
    assert jnp.allclose(prec, m_prec, atol=1e-6), (prec, m_prec)

    # Loose sanity check against the exact f32 reference (PyTorch semantics);
    # the only deviation is the bf16 Gram rounding.
    r_loss, r_prec = _reference(inputs, targets, 1.0, bf16_gram=False)
    assert jnp.allclose(loss, r_loss, rtol=5e-2, atol=5e-2), (loss, r_loss)

    print("KERNEL_OK")
</pallas_src>

<mosaic_0001>
module attributes {stable_mosaic.version = 11 : i64} {
  func.func @_triplet_tile_kernel(%arg0: i32, %arg1: i32, %arg2: memref<16x128xbf16, #tpu.memory_space<vmem>>, %arg3: memref<16x128xbf16, #tpu.memory_space<vmem>>, %arg4: memref<16x1xf32, #tpu.memory_space<vmem>>, %arg5: memref<1x16xf32, #tpu.memory_space<vmem>>, %arg6: memref<16x1xi32, #tpu.memory_space<vmem>>, %arg7: memref<1x16xi32, #tpu.memory_space<vmem>>, %arg8: memref<16x1xf32, #tpu.memory_space<vmem>>, %arg9: memref<16x1xf32, #tpu.memory_space<vmem>>, %arg10: memref<16x1xf32, #tpu.memory_space<vmem>>, %arg11: memref<16x1xf32, #tpu.memory_space<vmem>>) attributes {dimension_semantics = [#tpu.dimension_semantics<parallel>, #tpu.dimension_semantics<arbitrary>], iteration_bounds = array<i64: 1, 1>, scalar_prefetch = 0 : i64, scratch_operands = 2 : i64, tpu.core_type = #tpu.core_type<tc>, window_params = [{transform_indices = @transform_0, window_bounds = array<i64: 16, 128>}, {transform_indices = @transform_1, window_bounds = array<i64: 16, 128>}, {transform_indices = @transform_2, window_bounds = array<i64: 16, 1>}, {pipeline_mode = #tpu.pipeline_mode<synchronous>, transform_indices = @transform_3, window_bounds = array<i64: 1, 16>}, {transform_indices = @transform_4, window_bounds = array<i64: 16, 1>}, {pipeline_mode = #tpu.pipeline_mode<synchronous>, transform_indices = @transform_5, window_bounds = array<i64: 1, 16>}, {transform_indices = @transform_6, window_bounds = array<i64: 16, 1>}, {transform_indices = @transform_7, window_bounds = array<i64: 16, 1>}]} {
    %c0_i32 = arith.constant 0 : i32
    %0 = arith.cmpi eq, %arg1, %c0_i32 : i32
    %1 = arith.extui %0 : i1 to i32
    %c0_i32_0 = arith.constant 0 : i32
    %2 = arith.cmpi ne, %1, %c0_i32_0 : i32
    scf.if %2 {
      %cst_25 = arith.constant 0xFF800000 : f32
      %46 = vector.broadcast %cst_25 : f32 to vector<16x1xf32>
      %c0_26 = arith.constant 0 : index
      %c0_27 = arith.constant 0 : index
      %47 = vector.load %arg10[%c0_26, %c0_27] : memref<16x1xf32, #tpu.memory_space<vmem>>, vector<16x1xf32>
      tpu.vector_store %arg10[%c0_26, %c0_27], %46 {strides = array<i32>} : memref<16x1xf32, #tpu.memory_space<vmem>>, vector<16x1xf32>,
      %cst_28 = arith.constant 0x7F800000 : f32
      %48 = vector.broadcast %cst_28 : f32 to vector<16x1xf32>
      %c0_29 = arith.constant 0 : index
      %c0_30 = arith.constant 0 : index
      %49 = vector.load %arg11[%c0_29, %c0_30] : memref<16x1xf32, #tpu.memory_space<vmem>>, vector<16x1xf32>
      tpu.vector_store %arg11[%c0_29, %c0_30], %48 {strides = array<i32>} : memref<16x1xf32, #tpu.memory_space<vmem>>, vector<16x1xf32>,
    } else {
    }
    %c0 = arith.constant 0 : index
    %c0_1 = arith.constant 0 : index
    %3 = vector.load %arg2[%c0, %c0_1] : memref<16x128xbf16, #tpu.memory_space<vmem>>, vector<16x128xbf16>
    %c0_2 = arith.constant 0 : index
    %c0_3 = arith.constant 0 : index
    %4 = vector.load %arg3[%c0_2, %c0_3] : memref<16x128xbf16, #tpu.memory_space<vmem>>, vector<16x128xbf16>
    %cst = arith.constant dense<0.000000e+00> : vector<16x16xf32>
    %5 = tpu.matmul %3, %4, %cst {dimension_numbers = #tpu.dot_dimension_numbers<[1], [1], [0], [0], [0, 0, 1, 0], [], []>} : vector<16x128xbf16>, vector<16x128xbf16>, vector<16x16xf32> -> vector<16x16xf32>
    %6 = arith.index_cast %arg1 : i32 to index
    %c0_4 = arith.constant 0 : index
    %7 = vector.load %arg5[%6, %c0_4] : memref<1x16xf32, #tpu.memory_space<vmem>>, vector<1x16xf32>
    %8 = arith.index_cast %arg1 : i32 to index
    %c0_5 = arith.constant 0 : index
    %9 = vector.load %arg7[%8, %c0_5] : memref<1x16xi32, #tpu.memory_space<vmem>>, vector<1x16xi32>
    %c0_6 = arith.constant 0 : index
    %c0_7 = arith.constant 0 : index
    %10 = vector.load %arg4[%c0_6, %c0_7] : memref<16x1xf32, #tpu.memory_space<vmem>>, vector<16x1xf32>
    %11 = vector.broadcast %10 : vector<16x1xf32> to vector<16x16xf32>
    %12 = vector.broadcast %7 : vector<1x16xf32> to vector<16x16xf32>
    %13 = arith.addf %11, %12 : vector<16x16xf32>
    %cst_8 = arith.constant 2.000000e+00 : f32
    %14 = vector.broadcast %cst_8 : f32 to vector<16x16xf32>
    %15 = arith.mulf %14, %5 : vector<16x16xf32>
    %16 = arith.subf %13, %15 : vector<16x16xf32>
    %c0_9 = arith.constant 0 : index
    %c0_10 = arith.constant 0 : index
    %17 = vector.load %arg6[%c0_9, %c0_10] : memref<16x1xi32, #tpu.memory_space<vmem>>, vector<16x1xi32>
    %18 = vector.broadcast %17 : vector<16x1xi32> to vector<16x16xi32>
    %19 = vector.broadcast %9 : vector<1x16xi32> to vector<16x16xi32>
    %20 = arith.cmpi eq, %18, %19 : vector<16x16xi32>
    %c16_i32 = arith.constant 16 : i32
    %21 = arith.muli %arg1, %c16_i32 : i32
    %22 = tpu.iota {dimensions = array<i32: 1>} : vector<1x16xi32>
    %23 = vector.broadcast %21 : i32 to vector<1x16xi32>
    %24 = arith.addi %23, %22 : vector<1x16xi32>
    %c8_i32 = arith.constant 8 : i32
    %25 = vector.broadcast %c8_i32 : i32 to vector<1x16xi32>
    %26 = arith.cmpi slt, %24, %25 : vector<1x16xi32>
    %27 = vector.broadcast %26 : vector<1x16xi1> to vector<16x16xi1>
    %28 = arith.andi %20, %27 : vector<16x16xi1>
    %c0_11 = arith.constant 0 : index
    %c0_12 = arith.constant 0 : index
    %29 = vector.load %arg10[%c0_11, %c0_12] : memref<16x1xf32, #tpu.memory_space<vmem>>, vector<16x1xf32>
    %cst_13 = arith.constant 0xFF800000 : f32
    %30 = vector.broadcast %cst_13 : f32 to vector<16x16xf32>
    %31 = arith.select %28, %16, %30 : vector<16x16xi1>, vector<16x16xf32>
    %cst_14 = arith.constant dense<0xFF800000> : vector<16xf32>
    %32 = vector.multi_reduction <maximumf>, %31, %cst_14 [1] : vector<16x16xf32> to vector<16xf32>
    %33 = vector.shape_cast %32 : vector<16xf32> to vector<16x1xf32>
    %34 = arith.maximumf %29, %33 : vector<16x1xf32>
    %c0_15 = arith.constant 0 : index
    %c0_16 = arith.constant 0 : index
    %35 = vector.load %arg10[%c0_15, %c0_16] : memref<16x1xf32, #tpu.memory_space<vmem>>, vector<16x1xf32>
    tpu.vector_store %arg10[%c0_15, %c0_16], %34 {strides = array<i32>} : memref<16x1xf32, #tpu.memory_space<vmem>>, vector<16x1xf32>,
    %c0_17 = arith.constant 0 : index
    %c0_18 = arith.constant 0 : index
    %36 = vector.load %arg11[%c0_17, %c0_18] : memref<16x1xf32, #tpu.memory_space<vmem>>, vector<16x1xf32>
    %cst_19 = arith.constant 0x7F800000 : f32
    %37 = vector.broadcast %cst_19 : f32 to vector<16x16xf32>
    %38 = arith.select %20, %37, %16 : vector<16x16xi1>, vector<16x16xf32>
    %cst_20 = arith.constant dense<0x7F800000> : vector<16xf32>
    %39 = vector.multi_reduction <minimumf>, %38, %cst_20 [1] : vector<16x16xf32> to vector<16xf32>
    %40 = vector.shape_cast %39 : vector<16xf32> to vector<16x1xf32>
    %41 = arith.minimumf %36, %40 : vector<16x1xf32>
    %c0_21 = arith.constant 0 : index
    %c0_22 = arith.constant 0 : index
    %42 = vector.load %arg11[%c0_21, %c0_22] : memref<16x1xf32, #tpu.memory_space<vmem>>, vector<16x1xf32>
    tpu.vector_store %arg11[%c0_21, %c0_22], %41 {strides = array<i32>} : memref<16x1xf32, #tpu.memory_space<vmem>>, vector<16x1xf32>,
    %c0_i32_23 = arith.constant 0 : i32
    %43 = arith.cmpi eq, %arg1, %c0_i32_23 : i32
    %44 = arith.extui %43 : i1 to i32
    %c0_i32_24 = arith.constant 0 : i32
    %45 = arith.cmpi ne, %44, %c0_i32_24 : i32
    scf.if %45 {
      %c0_25 = arith.constant 0 : index
      %c0_26 = arith.constant 0 : index
      %46 = vector.load %arg10[%c0_25, %c0_26] : memref<16x1xf32, #tpu.memory_space<vmem>>, vector<16x1xf32>
      %cst_27 = arith.constant 9.99999996E-13 : f32
      %47 = vector.broadcast %cst_27 : f32 to vector<16x1xf32>
      %48 = arith.maximumf %46, %47 : vector<16x1xf32>
      %49 = math.sqrt %48 : vector<16x1xf32>
      %c0_28 = arith.constant 0 : index
      %c0_29 = arith.constant 0 : index
      %50 = vector.load %arg11[%c0_28, %c0_29] : memref<16x1xf32, #tpu.memory_space<vmem>>, vector<16x1xf32>
      %cst_30 = arith.constant 9.99999996E-13 : f32
      %51 = vector.broadcast %cst_30 : f32 to vector<16x1xf32>
      %52 = arith.maximumf %50, %51 : vector<16x1xf32>
      %53 = math.sqrt %52 : vector<16x1xf32>
      %54 = arith.subf %49, %53 : vector<16x1xf32>
      %cst_31 = arith.constant 1.000000e+00 : f32
      %55 = vector.broadcast %cst_31 : f32 to vector<16x1xf32>
      %56 = arith.addf %54, %55 : vector<16x1xf32>
      %cst_32 = arith.constant 0.000000e+00 : f32
      %57 = vector.broadcast %cst_32 : f32 to vector<16x1xf32>
      %58 = arith.maximumf %56, %57 : vector<16x1xf32>
      %c0_33 = arith.constant 0 : index
      %c0_34 = arith.constant 0 : index
      %59 = vector.load %arg8[%c0_33, %c0_34] : memref<16x1xf32, #tpu.memory_space<vmem>>, vector<16x1xf32>
      tpu.vector_store %arg8[%c0_33, %c0_34], %58 {strides = array<i32>} : memref<16x1xf32, #tpu.memory_space<vmem>>, vector<16x1xf32>,
      %60 = arith.cmpf ogt, %53, %49 : vector<16x1xf32>
      %61 = arith.extui %60 : vector<16x1xi1> to vector<16x1xi32>
      %62 = arith.sitofp %61 : vector<16x1xi32> to vector<16x1xf32>
      %c0_35 = arith.constant 0 : index
      %c0_36 = arith.constant 0 : index
      %63 = vector.load %arg9[%c0_35, %c0_36] : memref<16x1xf32, #tpu.memory_space<vmem>>, vector<16x1xf32>
      tpu.vector_store %arg9[%c0_35, %c0_36], %62 {strides = array<i32>} : memref<16x1xf32, #tpu.memory_space<vmem>>, vector<16x1xf32>,
    } else {
    }
    return
  }
  func.func @transform_0(%arg0: i32, %arg1: i32) -> (i32, i32) {
    %c0_i32 = arith.constant 0 : i32
    %c0_i32_0 = arith.constant 0 : i32
    return %arg0, %c0_i32 : i32, i32
  }
  func.func @transform_1(%arg0: i32, %arg1: i32) -> (i32, i32) {
    %c0_i32 = arith.constant 0 : i32
    %c0_i32_0 = arith.constant 0 : i32
    return %arg1, %c0_i32 : i32, i32
  }
  func.func @transform_2(%arg0: i32, %arg1: i32) -> (i32, i32) {
    %c0_i32 = arith.constant 0 : i32
    %c0_i32_0 = arith.constant 0 : i32
    return %arg0, %c0_i32 : i32, i32
  }
  func.func @transform_3(%arg0: i32, %arg1: i32) -> (i32, i32) {
    %c0_i32 = arith.constant 0 : i32
    %c0_i32_0 = arith.constant 0 : i32
    %c0_i32_1 = arith.constant 0 : i32
    return %c0_i32, %c0_i32_0 : i32, i32
  }
  func.func @transform_4(%arg0: i32, %arg1: i32) -> (i32, i32) {
    %c0_i32 = arith.constant 0 : i32
    %c0_i32_0 = arith.constant 0 : i32
    return %arg0, %c0_i32 : i32, i32
  }
  func.func @transform_5(%arg0: i32, %arg1: i32) -> (i32, i32) {
    %c0_i32 = arith.constant 0 : i32
    %c0_i32_0 = arith.constant 0 : i32
    %c0_i32_1 = arith.constant 0 : i32
    return %c0_i32, %c0_i32_0 : i32, i32
  }
  func.func @transform_6(%arg0: i32, %arg1: i32) -> (i32, i32) {
    %c0_i32 = arith.constant 0 : i32
    %c0_i32_0 = arith.constant 0 : i32
    return %arg0, %c0_i32 : i32, i32
  }
  func.func @transform_7(%arg0: i32, %arg1: i32) -> (i32, i32) {
    %c0_i32 = arith.constant 0 : i32
    %c0_i32_0 = arith.constant 0 : i32
    return %arg0, %c0_i32 : i32, i32
  }
}

</mosaic_0001>

<llo_original>
// kernel: tpu_custom_call.1
$region0: #{tpu_custom_call.1}
  #allocation0 [shape = 'u32[]', space=smem, size = 0x4, offset = 0x4, fixed_abs, tag = 'smem constant byte address 0x4 - core index']
  #allocation1 [shape = 'u32[144,128]{1,0:T(1,128)}', space=vmem, size = 0x12000, scoped, tag = 'internal scratch']
  #allocation2 [shape = 'f32[16,1]{1,0:T(8,128)}', space=vmem, size = 0x2000, scoped, tag = 'scratch operand']
  #allocation3 [shape = 'f32[16,1]{1,0:T(8,128)}', space=vmem, size = 0x2000, scoped, tag = 'scratch operand']
  %s0 = inlined_call_operand.vmem [shape: bf16[16,128], index: 0, kind: input, shape index: {}]
  %s1 = inlined_call_operand.vmem [shape: bf16[16,128], index: 1, kind: input, shape index: {}]
  %s2 = inlined_call_operand.vmem [shape: f32[16,1], index: 2, kind: input, shape index: {}]
  %s3 = inlined_call_operand.vmem [shape: f32[1,16], index: 3, kind: input, shape index: {}]
  %s4 = inlined_call_operand.vmem [shape: s32[16,1], index: 4, kind: input, shape index: {}]
  %s5 = inlined_call_operand.vmem [shape: s32[1,16], index: 5, kind: input, shape index: {}]
  %s6 = inlined_call_operand.vmem [shape: f32[16,1], index: 6, kind: output, shape index: {0}]
  %s7 = inlined_call_operand.vmem [shape: f32[16,1], index: 7, kind: output, shape index: {1}]
  %8 = xla_tuple %s6, %s7
  %s9 = sld [smem:[#allocation0]]
  $region50: #{tpu_custom_call.1} parent=0
    _
  %s11 = ssub.s32 1, %s9
  %s12 = scalar_select 0, %s11, %s9
  // Predicated region
  $region2: #{tpu_custom_call.1} parent=0 // pred_check
    _
  $region3: #{tpu_custom_call.1} parent=0 // pred_check_branch
    %14 = sbr.rel (0) target = $region5
  $region4: #{tpu_custom_call.1} parent=0 // pred_region
    _
  $region5: #{tpu_custom_call.1} parent=0 // pred_fallthru
    _
  // Predicated region
  $region6: #{tpu_custom_call.1} parent=0 // pred_check
    _
  $region7: #{tpu_custom_call.1} parent=0 // pred_check_branch
    %16 = sbr.rel (0) target = $region9
  $region8: #{tpu_custom_call.1} parent=0 // pred_region
    _
  $region9: #{tpu_custom_call.1} parent=0 // pred_fallthru
    _
  // Predicated region
  $region10: #{tpu_custom_call.1} parent=0 // pred_check
    _
  $region11: #{tpu_custom_call.1} parent=0 // pred_check_branch
    %18 = sbr.rel (0) target = $region13
  $region12: #{tpu_custom_call.1} parent=0 // pred_region
    _
  $region13: #{tpu_custom_call.1} parent=0 // pred_fallthru
    _
  // Predicated region
  $region14: #{tpu_custom_call.1} parent=0 // pred_check
    _
  $region15: #{tpu_custom_call.1} parent=0 // pred_check_branch
    %20 = sbr.rel (0) target = $region17
  $region16: #{tpu_custom_call.1} parent=0 // pred_region
    _
  $region17: #{tpu_custom_call.1} parent=0 // pred_fallthru
    _
  // Predicated region
  $region18: #{tpu_custom_call.1} parent=0 // pred_check
    _
  $region19: #{tpu_custom_call.1} parent=0 // pred_check_branch
    %22 = sbr.rel (0) target = $region21
  $region20: #{tpu_custom_call.1} parent=0 // pred_region
    _
  $region21: #{tpu_custom_call.1} parent=0 // pred_fallthru
    _
  // Predicated region
  $region22: #{tpu_custom_call.1} parent=0 // pred_check
    _
  $region23: #{tpu_custom_call.1} parent=0 // pred_check_branch
    %24 = sbr.rel (0) target = $region25
  $region24: #{tpu_custom_call.1} parent=0 // pred_region
    _
  $region25: #{tpu_custom_call.1} parent=0 // pred_fallthru
    _
  %p26 = scmp.eq.s32.totalorder 0, 0
  // Predicated region
  $region26: #{tpu_custom_call.1} parent=0 // pred_check
    %p27 = pneg %p26
  $region27: #{tpu_custom_call.1} parent=0 // pred_check_branch
    %29 = sbr.rel (%p27) target = $region29
  $region28: #{tpu_custom_call.1} parent=0 // pred_region
    %vm30 = vcmask 7168
    %31 = vst.msk [vmem:[#allocation2] sm:$0xff] %vm30, -inf
    %32 = vst.msk [vmem:[#allocation2 + $0x8] sm:$0xff] %vm30, -inf
    %33 = vst.msk [vmem:[#allocation3] sm:$0xff] %vm30, inf
    %34 = vst.msk [vmem:[#allocation3 + $0x8] sm:$0xff] %vm30, inf
  $region29: #{tpu_custom_call.1} parent=0 // pred_fallthru
    _
  %v35 = vld [vmem:[%s0] sm:$0xf]
  %v36 = vld [vmem:[%s0 + $0x4] sm:$0xf]
  %v37 = vld [vmem:[%s1] sm:$0xf]
  %v38 = vld [vmem:[%s1 + $0x4] sm:$0xf]
  %v41 = vunpack.c.l.b16 %v35
  %v42 = vunpack.c.l.b16 %v36
  %v43 = vpack.c.b16 %v42, %v41
  %v47 = vunpack.c.l.b16 %v37
  %v48 = vunpack.c.l.b16 %v38
  %v49 = vpack.c.b16 %v48, %v47
  %51 = vmatprep.subr.bf16.mxu0 0
  %52 = vmatpush1.bf16.xpose.msra.mxu0 %v49
  %53 = vmatprep.subr.bf16.mxu0 0
  %54 = vmatpush1.bf16.xpose.msra.mxu0 0
  %55 = vmatprep.subr.bf16.mxu0 0
  %56 = vmatpush1.bf16.xpose.msra.mxu0 0
  %57 = vmatprep.subr.bf16.mxu0 0
  %58 = vmatpush1.bf16.xpose.msra.mxu0 0
  %59 = vmatprep.subr.bf16.mxu0 0
  %60 = vmatpush1.bf16.xpose.msra.mxu0 0
  %61 = vmatprep.subr.bf16.mxu0 0
  %62 = vmatpush1.bf16.xpose.msra.mxu0 0
  %63 = vmatprep.subr.bf16.mxu0 0
  %64 = vmatpush1.bf16.xpose.msra.mxu0 0
  %65 = vmatprep.subr.bf16.mxu0 0
  %66 = vmatpush1.bf16.xpose.msra.mxu0 0
  %67 = vmatprep.subr.bf16.mxu0 0
  %68 = vmatpush1.bf16.xpose.msra.mxu0 0
  %69 = vmatprep.subr.bf16.mxu0 0
  %70 = vmatpush1.bf16.xpose.msra.mxu0 0
  %71 = vmatprep.subr.bf16.mxu0 0
  %72 = vmatpush1.bf16.xpose.msra.mxu0 0
  %73 = vmatprep.subr.bf16.mxu0 0
  %74 = vmatpush1.bf16.xpose.msra.mxu0 0
  %75 = vmatprep.subr.bf16.mxu0 0
  %76 = vmatpush1.bf16.xpose.msra.mxu0 0
  %77 = vmatprep.subr.bf16.mxu0 0
  %78 = vmatpush1.bf16.xpose.msra.mxu0 0
  %79 = vmatprep.subr.bf16.mxu0 0
  %80 = vmatpush1.bf16.xpose.msra.mxu0 0
  %81 = vmatprep.subr.bf16.mxu0 0
  %82 = vmatpush1.bf16.xpose.msra.mxu0 0
  %83 = vmatprep.mubr.bf16.mxu0 0
  %84 = vmatmul.mubr.bf16.gmra.mrb[0].mxu0 %v43
  %v85 = vpop.f32.mrb[0].mxu0
  %v86 = vadd.f32 0.0, %v85
  %v87 = vpop.f32.mrb[0].mxu0
  %v88 = vpop.f32.mrb[0].mxu0
  %v89 = vadd.f32 0.0, %v88
  %v90 = vpop.f32.mrb[0].mxu0
  %91 = vdwg.mxu0
  %v92 = vld [vmem:[%s3] sm:$0x1]
  %v93 = vld [vmem:[%s5] sm:$0x1]
  %v94 = vld [vmem:[%s2] sm:$0xff]
  %v95 = vld [vmem:[%s2 + $0x8] sm:$0xff]
  %97 = vset.pattern.permute.xlu0 0
  %98 = vperm.xlu0 %97, %v94
  %v99 = vpop.permute.xlu0 %98
  %102 = vset.pattern.permute.xlu0 0
  %103 = vperm.xlu0 %102, %v95
  %v104 = vpop.permute.xlu0 %103
  %v107 = vlaneseq
  %v108 = vshrl.u32 %v107, 7
  %v109 = vsub.s32 0, %v108
  %v110 = vrot.slane %v92, %v109
  %v112 = vadd.f32 %v99, %v110
  %v113 = vadd.f32 %v104, %v110
  %v114 = vmul.f32 %v86, 2.0
  %v115 = vmul.f32 %v89, 2.0
  %v116 = vsub.f32 %v112, %v114
  %v117 = vsub.f32 %v113, %v115
  %v118 = vld [vmem:[%s4] sm:$0xff]
  %v119 = vld [vmem:[%s4 + $0x8] sm:$0xff]
  %120 = vset.pattern.permute.xlu0 0
  %121 = vperm.xlu0 %120, %v118
  %v122 = vpop.permute.xlu0 %121
  %123 = vset.pattern.permute.xlu0 0
  %124 = vperm.xlu0 %123, %v119
  %v125 = vpop.permute.xlu0 %124
  %v126 = vlaneseq
  %v127 = vshrl.u32 %v126, 7
  %v128 = vsub.s32 0, %v127
  %v129 = vrot.slane %v93, %v128
  %vm130 = vcmp.eq.s32.totalorder %v122, %v129
  %vm131 = vcmp.eq.s32.totalorder %v125, %v129
  %s132 = smul.u32 0, 16
  %v133 = vlaneseq
  %v134 = vand.u32 %v133, 127
  %v135 = vstv %s132
  %v136 = vadd.s32 %v135, %v134
  %vm137 = vcmp.lt.s32.totalorder %v136, 8
  %v138 = vsel %vm137, 1, 0
  %vm139 = vcmp.eq.s32.totalorder %v138, 1
  %vm140 = vmand %vm130, %vm139
  %vm141 = vmand %vm131, %vm139
  %v142 = vld [vmem:[#allocation2] sm:$0xff]
  %v143 = vld [vmem:[#allocation2 + $0x8] sm:$0xff]
  %v144 = vsel %vm140, %v116, -inf
  %v145 = vsel %vm141, %v117, -inf
  %vm146 = vcmask 130048
  %v147 = vsel %vm146, %v144, -inf
  %148 = vmax.xlane.f32.xlu0 %v147
  %v149 = vpop.xlane.xlu0 %148
  %v150 = vsel %vm146, %v145, -inf
  %151 = vmax.xlane.f32.xlu0 %v150
  %v152 = vpop.xlane.xlu0 %151
  %v153 = vmax.f32 %v142, %v149
  %v154 = vmax.f32 %v143, %v152
  %vm155 = vcmask 7168
  %156 = vst.msk [vmem:[#allocation2] sm:$0xff] %vm155, %v153
  %157 = vst.msk [vmem:[#allocation2 + $0x8] sm:$0xff] %vm155, %v154
  %v158 = vld [vmem:[#allocation3] sm:$0xff]
  %v159 = vld [vmem:[#allocation3 + $0x8] sm:$0xff]
  %v160 = vsel %vm130, inf, %v116
  %v161 = vsel %vm131, inf, %v117
  %v162 = vsel %vm146, %v160, inf
  %163 = vmin.xlane.f32.xlu0 %v162
  %v164 = vpop.xlane.xlu0 %163
  %v165 = vsel %vm146, %v161, inf
  %166 = vmin.xlane.f32.xlu0 %v165
  %v167 = vpop.xlane.xlu0 %166
  %v168 = vmin.f32 %v158, %v164
  %v169 = vmin.f32 %v159, %v167
  %170 = vst.msk [vmem:[#allocation3] sm:$0xff] %vm155, %v168
  %171 = vst.msk [vmem:[#allocation3 + $0x8] sm:$0xff] %vm155, %v169
  // Predicated region
  $region30: #{tpu_custom_call.1} parent=0 // pred_check
    %p172 = pneg %p26
  $region31: #{tpu_custom_call.1} parent=0 // pred_check_branch
    %174 = sbr.rel (%p172) target = $region33
  $region32: #{tpu_custom_call.1} parent=0 // pred_region
    %v175 = vld [vmem:[#allocation2] sm:$0xff]
    %v176 = vld [vmem:[#allocation2 + $0x8] sm:$0xff]
    %v177 = vmax.f32 %v175, 1e-12
    %v178 = vmax.f32 %v176, 1e-12
    %v179 = vrsqrt.pop %v177
    %v180 = vmul.f32 %v177, %v179
    %vm181 = vcmp.eq.f32.partialorder %v177, inf
    %v182 = vsel %vm181, %v177, %v180
    %vm183 = vcmp.eq.f32.partialorder %v177, 0.0
    %v184 = vand.u32 %v177, 2147483648
    %v185 = vsel %vm183, %v184, %v182
    %v186 = vrsqrt.pop %v178
    %v187 = vmul.f32 %v178, %v186
    %vm188 = vcmp.eq.f32.partialorder %v178, inf
    %v189 = vsel %vm188, %v178, %v187
    %vm190 = vcmp.eq.f32.partialorder %v178, 0.0
    %v191 = vand.u32 %v178, 2147483648
    %v192 = vsel %vm190, %v191, %v189
    %v193 = vld [vmem:[#allocation3] sm:$0xff]
    %v194 = vld [vmem:[#allocation3 + $0x8] sm:$0xff]
    %v195 = vmax.f32 %v193, 1e-12
    %v196 = vmax.f32 %v194, 1e-12
    %v197 = vrsqrt.pop %v195
    %v198 = vmul.f32 %v195, %v197
    %vm199 = vcmp.eq.f32.partialorder %v195, inf
    %v200 = vsel %vm199, %v195, %v198
    %vm201 = vcmp.eq.f32.partialorder %v195, 0.0
    %v202 = vand.u32 %v195, 2147483648
    %v203 = vsel %vm201, %v202, %v200
    %v204 = vrsqrt.pop %v196
    %v205 = vmul.f32 %v196, %v204
    %vm206 = vcmp.eq.f32.partialorder %v196, inf
    %v207 = vsel %vm206, %v196, %v205
    %vm208 = vcmp.eq.f32.partialorder %v196, 0.0
    %v209 = vand.u32 %v196, 2147483648
    %v210 = vsel %vm208, %v209, %v207
    %v211 = vsub.f32 %v185, %v203
    %v212 = vsub.f32 %v192, %v210
    %v213 = vadd.f32 %v211, 1.0
    %v214 = vadd.f32 %v212, 1.0
    %v215 = vmax.f32 %v213, 0.0
    %v216 = vmax.f32 %v214, 0.0
    %217 = vst.msk [vmem:[%s6] sm:$0xff] %vm155, %v215
    %218 = vst.msk [vmem:[%s6 + $0x8] sm:$0xff] %vm155, %v216
    %vm219 = vcmp.gt.f32.partialorder %v203, %v185
    %vm220 = vcmp.gt.f32.partialorder %v210, %v192
    %v221 = vsel %vm219, 1, 0
    %v222 = vsel %vm220, 1, 0
    %v223 = vcvt.s32.f32 %v221
    %v224 = vcvt.s32.f32 %v222
    %225 = vst.msk [vmem:[%s7] sm:$0xff] %vm155, %v223
    %226 = vst.msk [vmem:[%s7 + $0x8] sm:$0xff] %vm155, %v224
  $region33: #{tpu_custom_call.1} parent=0 // pred_fallthru
    _
  // Predicated region
  $region34: #{tpu_custom_call.1} parent=0 // pred_check
    _
  $region35: #{tpu_custom_call.1} parent=0 // pred_check_branch
    %228 = sbr.rel (0) target = $region37
  $region36: #{tpu_custom_call.1} parent=0 // pred_region
    _
  $region37: #{tpu_custom_call.1} parent=0 // pred_fallthru
    _
  // Predicated region
  $region38: #{tpu_custom_call.1} parent=0 // pred_check
    _
  $region39: #{tpu_custom_call.1} parent=0 // pred_check_branch
    %230 = sbr.rel (0) target = $region41
  $region40: #{tpu_custom_call.1} parent=0 // pred_region
    _
  $region41: #{tpu_custom_call.1} parent=0 // pred_fallthru
    _
  // Predicated region
  $region42: #{tpu_custom_call.1} parent=0 // pred_check
    _
  $region43: #{tpu_custom_call.1} parent=0 // pred_check_branch
    %232 = sbr.rel (0) target = $region45
  $region44: #{tpu_custom_call.1} parent=0 // pred_region
    _
  $region45: #{tpu_custom_call.1} parent=0 // pred_fallthru
    _
  // Predicated region
  $region46: #{tpu_custom_call.1} parent=0 // pred_check
    _
  $region47: #{tpu_custom_call.1} parent=0 // pred_check_branch
    %234 = sbr.rel (0) target = $region49
  $region48: #{tpu_custom_call.1} parent=0 // pred_region
    _
  $region49: #{tpu_custom_call.1} parent=0 // pred_fallthru
    _

</llo_original>
